<compile_context>
chip_gen: v7x
topology: tpu7x:2x2x1
jax: 0.10.0
libtpu: 0.0.40
codegen_flags: <defaults>
</compile_context>

<pallas_src>
import jax
import jax.numpy as jnp
from jax.experimental import pallas as pl
from jax.experimental.pallas import tpu as pltpu


_LANE = 128


def _round_up(v, m):
    return (v + m - 1) // m * m


def _dim_reduce_kernel(x_ref, w_ref, shift_ref, o_ref):
    # x_ref:     (tile_rows, C_in_pad)   compute dtype (bf16)
    # w_ref:     (C_in_pad, C_out_pad)   compute dtype (bf16), BN scale folded in
    # shift_ref: (1, C_out_pad)          f32 = bias*scale + beta - mean*scale
    # o_ref:     (tile_rows, C_out_pad)  output dtype
    z = jnp.dot(x_ref[...], w_ref[...], preferred_element_type=jnp.float32)
    z = z + shift_ref[...]                                 # Linear bias + BN (folded)
    o_ref[...] = jnp.maximum(z, 0.0).astype(o_ref.dtype)   # ReLU


def fold_params(params, compute_dtype=jnp.bfloat16):
    """Fold Linear bias + eval-mode BatchNorm1d into weight/shift (do once)."""
    w_t = params["w_t"].astype(jnp.float32)                 # (C_in, C_out)
    C_in, C_out = w_t.shape
    scale = params["gamma"] / jnp.sqrt(params["running_var"] + params["eps"])
    shift = params["beta"] - params["running_mean"] * scale
    w_eff = w_t * scale[None, :]                             # (C_in, C_out)
    shift_eff = params["bias"] * scale + shift               # (C_out,)

    # Pad features to multiples of 128 -> lane-dense matmul operands & output.
    C_in_pad = _round_up(C_in, _LANE)
    C_out_pad = _round_up(C_out, _LANE)
    w_eff = jnp.pad(w_eff, ((0, C_in_pad - C_in), (0, C_out_pad - C_out)))
    shift_eff = jnp.pad(shift_eff, (0, C_out_pad - C_out))

    return {
        "w_eff": w_eff.astype(compute_dtype),                # (C_in_pad, C_out_pad)
        "shift_eff": shift_eff.reshape(1, C_out_pad).astype(jnp.float32),
        "c_in": C_in,
        "c_out": C_out,
    }


def after_pooling_dim_reduce(x, folded, *, max_tile_rows=512):
    """Apply Linear -> BatchNorm1d(eval) -> ReLU to x (2-D or 3-D input)."""
    w_eff = folded["w_eff"]
    shift_eff = folded["shift_eff"]
    C_in = folded["c_in"]
    C_out = folded["c_out"]
    C_in_pad, C_out_pad = w_eff.shape
    compute_dtype = w_eff.dtype

    orig_ndim = x.ndim
    if orig_ndim == 3:
        N, K, _ = x.shape
        x2d = x.reshape(N * K, x.shape[-1])                  # matches x.flatten(0, 1)
    else:
        x2d = x
    B = x2d.shape[0]
    out_dtype = x2d.dtype

    # Row tile: multiple of 16 (bf16 sublane packing), capped so the per-step
    # footprint (2*tile*C_in_pad*2 + C_in_pad*C_out_pad*2 + 2*tile*C_out_pad*4)
    # stays well inside v7x's 32 MiB scoped VMEM default while still giving a
    # multi-step grid for pipelining / megacore at realistic batch sizes.
    tile_rows = min(max_tile_rows, _round_up(B, 16))
    B_pad = _round_up(B, tile_rows)

    # Zero-pad rows and the feature dim (exact for the matmul; padding is
    # sliced away below).  Cast to the compute dtype (bf16) once here.
    xp = jnp.pad(x2d.astype(jnp.float32),
                 ((0, B_pad - B), (0, C_in_pad - C_in))).astype(compute_dtype)

    grid = (B_pad // tile_rows,)

    cdt_bytes = jnp.dtype(compute_dtype).itemsize
    out_bytes = jnp.dtype(out_dtype).itemsize
    cost = pl.CostEstimate(
        flops=2 * B_pad * C_in_pad * C_out_pad,
        transcendentals=0,
        bytes_accessed=(B_pad * C_in_pad * cdt_bytes
                        + C_in_pad * C_out_pad * cdt_bytes
                        + C_out_pad * 4
                        + B_pad * C_out_pad * out_bytes),
    )

    out_pad = pl.pallas_call(
        _dim_reduce_kernel,
        out_shape=jax.ShapeDtypeStruct((B_pad, C_out_pad), out_dtype),
        grid_spec=pltpu.PrefetchScalarGridSpec(
            num_scalar_prefetch=0,
            grid=grid,
            in_specs=[
                pl.BlockSpec((tile_rows, C_in_pad), lambda i: (i, 0)),
                pl.BlockSpec((C_in_pad, C_out_pad), lambda i: (0, 0)),
                pl.BlockSpec((1, C_out_pad), lambda i: (0, 0)),
            ],
            out_specs=pl.BlockSpec((tile_rows, C_out_pad), lambda i: (i, 0)),
        ),
        compiler_params=pltpu.CompilerParams(
            dimension_semantics=("parallel",)),
        cost_estimate=cost,
    )(xp, w_eff, shift_eff)

    out2d = out_pad[:B, :C_out]
    if orig_ndim == 3:
        return out2d.reshape(N, K, C_out)
    return out2d


def init_params(key, input_dim, output_dim):
    """Deterministic init mirroring the PyTorch module's _init_params."""
    w = 0.01 * jax.random.normal(key, (output_dim, input_dim), jnp.float32)
    return {
        "w_t": w.T,                                          # (C_in, C_out)
        "bias": jnp.zeros((output_dim,), jnp.float32),       # Linear bias = 0
        "gamma": jnp.ones((output_dim,), jnp.float32),       # BN weight = 1
        "beta": jnp.zeros((output_dim,), jnp.float32),       # BN bias = 0
        "running_mean": jnp.zeros((output_dim,), jnp.float32),
        "running_var": jnp.ones((output_dim,), jnp.float32),
        "eps": jnp.float32(1e-5),
    }


if __name__ == "__main__":
    key = jax.random.PRNGKey(0)
    k_x, k_w = jax.random.split(key)

    N, K = 2, 4          # 3-D branch of the forward: (N, K, input_dim)
    input_dim, output_dim = 64, 32

    x = jax.random.normal(k_x, (N, K, input_dim), jnp.float32)
    params = init_params(k_w, input_dim, output_dim)
    folded = fold_params(params, compute_dtype=jnp.bfloat16)   # done once

    out = after_pooling_dim_reduce(x, folded)
    out = jax.block_until_ready(out)
    assert out.shape == (N, K, output_dim)

    # Reference 1 (tight): same bf16-input / f32-accumulate math in plain JAX.
    B = N * K
    x2d = x.reshape(B, input_dim)
    B_pad = _round_up(B, 16)
    C_in_pad = _round_up(input_dim, _LANE)
    xp = jnp.pad(x2d, ((0, B_pad - B), (0, C_in_pad - input_dim))).astype(jnp.bfloat16)
    z = jnp.dot(xp, folded["w_eff"], preferred_element_type=jnp.float32)
    ref_bf16 = jnp.maximum(z + folded["shift_eff"], 0.0)[:B, :output_dim]
    ref_bf16 = ref_bf16.astype(x.dtype).reshape(N, K, output_dim)
    assert jnp.allclose(out, ref_bf16, atol=1e-4, rtol=1e-4)

    # Reference 2 (loose, semantic): full-f32 Linear -> eval-mode BN -> ReLU.
    scale = params["gamma"] / jnp.sqrt(params["running_var"] + params["eps"])
    shift = params["beta"] - params["running_mean"] * scale
    z32 = x2d @ params["w_t"] + params["bias"]
    ref_f32 = jnp.maximum(z32 * scale + shift, 0.0).reshape(N, K, output_dim)
    assert jnp.allclose(out, ref_f32, atol=5e-3, rtol=5e-2)

    print("KERNEL_OK")
</pallas_src>

<mosaic_0001>
module attributes {stable_mosaic.version = 11 : i64} {
  func.func @_dim_reduce_kernel(%arg0: i32, %arg1: memref<16x128xbf16, #tpu.memory_space<vmem>>, %arg2: memref<128x128xbf16, #tpu.memory_space<vmem>>, %arg3: memref<1x128xf32, #tpu.memory_space<vmem>>, %arg4: memref<16x128xf32, #tpu.memory_space<vmem>>) attributes {dimension_semantics = [#tpu.dimension_semantics<parallel>], iteration_bounds = array<i64: 1>, scalar_prefetch = 0 : i64, scratch_operands = 0 : i64, tpu.core_type = #tpu.core_type<tc>, window_params = [{transform_indices = @transform_0, window_bounds = array<i64: 16, 128>}, {pipeline_mode = #tpu.pipeline_mode<synchronous>, transform_indices = @transform_1, window_bounds = array<i64: 128, 128>}, {pipeline_mode = #tpu.pipeline_mode<synchronous>, transform_indices = @transform_2, window_bounds = array<i64: 1, 128>}, {transform_indices = @transform_3, window_bounds = array<i64: 16, 128>}]} {
    %c0 = arith.constant 0 : index
    %c0_0 = arith.constant 0 : index
    %0 = vector.load %arg1[%c0, %c0_0] : memref<16x128xbf16, #tpu.memory_space<vmem>>, vector<16x128xbf16>
    %c0_1 = arith.constant 0 : index
    %c0_2 = arith.constant 0 : index
    %1 = vector.load %arg2[%c0_1, %c0_2] : memref<128x128xbf16, #tpu.memory_space<vmem>>, vector<128x128xbf16>
    %cst = arith.constant dense<0.000000e+00> : vector<16x128xf32>
    %2 = tpu.matmul %0, %1, %cst {dimension_numbers = #tpu.dot_dimension_numbers<[1], [0], [0], [1], [0, 0, 1, 1], [], []>} : vector<16x128xbf16>, vector<128x128xbf16>, vector<16x128xf32> -> vector<16x128xf32>
    %c0_3 = arith.constant 0 : index
    %c0_4 = arith.constant 0 : index
    %3 = vector.load %arg3[%c0_3, %c0_4] : memref<1x128xf32, #tpu.memory_space<vmem>>, vector<1x128xf32>
    %4 = vector.broadcast %3 : vector<1x128xf32> to vector<16x128xf32>
    %5 = arith.addf %2, %4 : vector<16x128xf32>
    %cst_5 = arith.constant 0.000000e+00 : f32
    %6 = vector.broadcast %cst_5 : f32 to vector<16x128xf32>
    %7 = arith.maximumf %5, %6 : vector<16x128xf32>
    %c0_6 = arith.constant 0 : index
    %c0_7 = arith.constant 0 : index
    %8 = vector.load %arg4[%c0_6, %c0_7] : memref<16x128xf32, #tpu.memory_space<vmem>>, vector<16x128xf32>
    tpu.vector_store %arg4[%c0_6, %c0_7], %7 {strides = array<i32>} : memref<16x128xf32, #tpu.memory_space<vmem>>, vector<16x128xf32>,
    return
  }
  func.func @transform_0(%arg0: i32) -> (i32, i32) {
    %c0_i32 = arith.constant 0 : i32
    %c0_i32_0 = arith.constant 0 : i32
    return %arg0, %c0_i32 : i32, i32
  }
  func.func @transform_1(%arg0: i32) -> (i32, i32) {
    %c0_i32 = arith.constant 0 : i32
    %c0_i32_0 = arith.constant 0 : i32
    %c0_i32_1 = arith.constant 0 : i32
    return %c0_i32, %c0_i32_0 : i32, i32
  }
  func.func @transform_2(%arg0: i32) -> (i32, i32) {
    %c0_i32 = arith.constant 0 : i32
    %c0_i32_0 = arith.constant 0 : i32
    %c0_i32_1 = arith.constant 0 : i32
    return %c0_i32, %c0_i32_0 : i32, i32
  }
  func.func @transform_3(%arg0: i32) -> (i32, i32) {
    %c0_i32 = arith.constant 0 : i32
    %c0_i32_0 = arith.constant 0 : i32
    return %arg0, %c0_i32 : i32, i32
  }
}

</mosaic_0001>

<llo_original>
// kernel: tpu_custom_call.1
$region0: #{tpu_custom_call.1}
  #allocation0 [shape = 'u32[]', space=smem, size = 0x4, offset = 0x4, fixed_abs, tag = 'smem constant byte address 0x4 - core index']
  #allocation1 [shape = 'u32[144,128]{1,0:T(1,128)}', space=vmem, size = 0x12000, scoped, tag = 'internal scratch']
  %s0 = inlined_call_operand.hbm [shape: bf16[16,128], index: 0, kind: input, shape index: {}]
  %s1 = inlined_call_operand.hbm [shape: bf16[128,128], index: 1, kind: input, shape index: {}]
  %s2 = inlined_call_operand.vmem [shape: f32[1,128], index: 2, kind: input, shape index: {}]
  %s3 = inlined_call_operand.hbm [shape: f32[16,128], index: 3, kind: output, shape index: {}]
  %s4 = sld [smem:[#allocation0]]
  $region30: #{tpu_custom_call.1} parent=0
    _
  %s6 = ssub.s32 1, %s4
  %s7 = scalar_select 0, %s6, %s4
  $region1: #{tpu_custom_call.1} parent=0
    #allocation2 [shape = 'u8[4096]{0}', space=vmem, size = 0x1000, scoped, tag = 'input window, operand 0, single buffered']
    #allocation3 [shape = 's32[1]{0}', space=sflag, size = 0x4, scoped, tag = 'scoped memory for tpu_custom_call.1']
    #allocation4 [shape = 's32[1]{0}', space=sflag, size = 0x4, scoped, tag = 'scoped memory for tpu_custom_call.1']
    #allocation5 [shape = 'u8[32768]{0}', space=vmem, size = 0x8000, scoped, tag = 'input window, operand 1, single buffered']
    #allocation6 [shape = 's32[1]{0}', space=sflag, size = 0x4, scoped, tag = 'scoped memory for tpu_custom_call.1']
    #allocation7 [shape = 'u8[8192]{0}', space=vmem, size = 0x2000, scoped, tag = 'output window, operand 0, single buffered']
    %8 = vsyncpa [#allocation3], 0
    %9 = vsyncpa [#allocation6], 0
    %10 = vsyncpa [#allocation4], 0
    // Predicated region
    $region2: #{tpu_custom_call.1} parent=1 // pred_check
      _
    $region3: #{tpu_custom_call.1} parent=1 // pred_check_branch
      %12 = sbr.rel (0) target = $region5
    $region4: #{tpu_custom_call.1} parent=1 // pred_region
      %s14 = ssub.s32 128, 128
      %15 = vsyncadd [#allocation3], %s14
      %s16 = sshll.u32 [#allocation2], 4
      %s17 = int_to_ptr.vmem [resolvable:$true] %s16
      %22 = dma.hbm_to_vmem [thread:$0]  %s0, 128, %s17, [#allocation3], 64, 64, 4
    $region5: #{tpu_custom_call.1} parent=1 // pred_fallthru
      _
    // Predicated region
    $region6: #{tpu_custom_call.1} parent=1 // pred_check
      _
    $region7: #{tpu_custom_call.1} parent=1 // pred_check_branch
      %24 = sbr.rel (0) target = $region9
    $region8: #{tpu_custom_call.1} parent=1 // pred_region
      %s26 = ssub.s32 1024, 1024
      %27 = vsyncadd [#allocation6], %s26
      %s28 = sshll.u32 [#allocation5], 4
      %s29 = int_to_ptr.vmem [resolvable:$true] %s28
      %34 = dma.hbm_to_vmem [thread:$0]  %s1, 1024, %s29, [#allocation6], 64, 64, 4
    $region9: #{tpu_custom_call.1} parent=1 // pred_fallthru
      _
    // Predicated region
    $region10: #{tpu_custom_call.1} parent=1 // pred_check
      _
    $region11: #{tpu_custom_call.1} parent=1 // pred_check_branch
      %36 = sbr.rel (0) target = $region13
    $region12: #{tpu_custom_call.1} parent=1 // pred_region
      _
    $region13: #{tpu_custom_call.1} parent=1 // pred_fallthru
      _
    // Predicated region
    $region14: #{tpu_custom_call.1} parent=1 // pred_check
      _
    $region15: #{tpu_custom_call.1} parent=1 // pred_check_branch
      %38 = sbr.rel (0) target = $region17
    $region16: #{tpu_custom_call.1} parent=1 // pred_region
      %39 = dma.done [#allocation3], 128
    $region17: #{tpu_custom_call.1} parent=1 // pred_fallthru
      _
    // Predicated region
    $region18: #{tpu_custom_call.1} parent=1 // pred_check
      _
    $region19: #{tpu_custom_call.1} parent=1 // pred_check_branch
      %41 = sbr.rel (0) target = $region21
    $region20: #{tpu_custom_call.1} parent=1 // pred_region
      %42 = dma.done [#allocation6], 1024
    $region21: #{tpu_custom_call.1} parent=1 // pred_fallthru
      _
    %v44 = vld [vmem:[#allocation2] sm:$0xf]
    %v45 = vld [vmem:[#allocation2 + $0x4] sm:$0xf]
    %v46 = vld [vmem:[#allocation5] sm:$0xf]
    %v47 = vld [vmem:[#allocation5 + $0x4] sm:$0xf]
    %v48 = vld [vmem:[#allocation5 + $0x8] sm:$0xf]
    %v49 = vld [vmem:[#allocation5 + $0xc] sm:$0xf]
    %v50 = vld [vmem:[#allocation5 + $0x10] sm:$0xf]
    %v51 = vld [vmem:[#allocation5 + $0x14] sm:$0xf]
    %v52 = vld [vmem:[#allocation5 + $0x18] sm:$0xf]
    %v53 = vld [vmem:[#allocation5 + $0x1c] sm:$0xf]
    %v54 = vld [vmem:[#allocation5 + $0x20] sm:$0xf]
    %v55 = vld [vmem:[#allocation5 + $0x24] sm:$0xf]
    %v56 = vld [vmem:[#allocation5 + $0x28] sm:$0xf]
    %v57 = vld [vmem:[#allocation5 + $0x2c] sm:$0xf]
    %v58 = vld [vmem:[#allocation5 + $0x30] sm:$0xf]
    %v59 = vld [vmem:[#allocation5 + $0x34] sm:$0xf]
    %v60 = vld [vmem:[#allocation5 + $0x38] sm:$0xf]
    %v61 = vld [vmem:[#allocation5 + $0x3c] sm:$0xf]
    %v62 = vld [vmem:[%s2] sm:$0x1]
    %v64 = vlaneseq
    %v65 = vshrl.u32 %v64, 7
    %v66 = vsub.s32 0, %v65
    %v67 = vrot.slane %v62, %v66
    %v71 = vunpack.c.l.b16 %v44
    %v72 = vunpack.c.l.b16 %v45
    %v73 = vpack.c.b16 %v72, %v71
    %v91 = vunpack.c.l.b16 %v46
    %v92 = vunpack.c.l.b16 %v47
    %v93 = vunpack.c.l.b16 %v48
    %v94 = vunpack.c.l.b16 %v49
    %v95 = vunpack.c.l.b16 %v50
    %v96 = vunpack.c.l.b16 %v51
    %v97 = vunpack.c.l.b16 %v52
    %v98 = vunpack.c.l.b16 %v53
    %v99 = vunpack.c.l.b16 %v54
    %v100 = vunpack.c.l.b16 %v55
    %v101 = vunpack.c.l.b16 %v56
    %v102 = vunpack.c.l.b16 %v57
    %v103 = vunpack.c.l.b16 %v58
    %v104 = vunpack.c.l.b16 %v59
    %v105 = vunpack.c.l.b16 %v60
    %v106 = vunpack.c.l.b16 %v61
    %v107 = vpack.c.b16 %v92, %v91
    %v108 = vpack.c.b16 %v94, %v93
    %v109 = vpack.c.b16 %v96, %v95
    %v110 = vpack.c.b16 %v98, %v97
    %v111 = vpack.c.b16 %v100, %v99
    %v112 = vpack.c.b16 %v102, %v101
    %v113 = vpack.c.b16 %v104, %v103
    %v114 = vpack.c.b16 %v106, %v105
    %123 = vmatprep.subr.bf16.mxu0 0
    %124 = vmatpush1.bf16.msra.mxu0 %v107
    %125 = vmatprep.subr.bf16.mxu0 0
    %126 = vmatpush1.bf16.msra.mxu0 %v108
    %127 = vmatprep.subr.bf16.mxu0 0
    %128 = vmatpush1.bf16.msra.mxu0 %v109
    %129 = vmatprep.subr.bf16.mxu0 0
    %130 = vmatpush1.bf16.msra.mxu0 %v110
    %131 = vmatprep.subr.bf16.mxu0 0
    %132 = vmatpush1.bf16.msra.mxu0 %v111
    %133 = vmatprep.subr.bf16.mxu0 0
    %134 = vmatpush1.bf16.msra.mxu0 %v112
    %135 = vmatprep.subr.bf16.mxu0 0
    %136 = vmatpush1.bf16.msra.mxu0 %v113
    %137 = vmatprep.subr.bf16.mxu0 0
    %138 = vmatpush1.bf16.msra.mxu0 %v114
    %139 = vmatprep.subr.bf16.mxu0 0
    %140 = vmatpush1.bf16.msra.mxu0 0
    %141 = vmatprep.subr.bf16.mxu0 0
    %142 = vmatpush1.bf16.msra.mxu0 0
    %143 = vmatprep.subr.bf16.mxu0 0
    %144 = vmatpush1.bf16.msra.mxu0 0
    %145 = vmatprep.subr.bf16.mxu0 0
    %146 = vmatpush1.bf16.msra.mxu0 0
    %147 = vmatprep.subr.bf16.mxu0 0
    %148 = vmatpush1.bf16.msra.mxu0 0
    %149 = vmatprep.subr.bf16.mxu0 0
    %150 = vmatpush1.bf16.msra.mxu0 0
    %151 = vmatprep.subr.bf16.mxu0 0
    %152 = vmatpush1.bf16.msra.mxu0 0
    %153 = vmatprep.subr.bf16.mxu0 0
    %154 = vmatpush1.bf16.msra.mxu0 0
    %155 = vmatprep.mubr.bf16.mxu0 0
    %156 = vmatmul.mubr.bf16.gmra.mrb[0].mxu0 %v73
    %v157 = vpop.f32.mrb[0].mxu0
    %v158 = vadd.f32 %v67, %v157
    %v159 = vpop.f32.mrb[0].mxu0
    %v160 = vpop.f32.mrb[0].mxu0
    %v161 = vadd.f32 %v67, %v160
    %v162 = vpop.f32.mrb[0].mxu0
    %163 = vdwg.mxu0
    %v164 = vmax.f32 %v158, 0.0
    %v165 = vmax.f32 %v161, 0.0
    %166 = vst [vmem:[#allocation7] sm:$0xff] %v164
    %167 = vst [vmem:[#allocation7 + $0x8] sm:$0xff] %v165
    // Predicated region
    $region22: #{tpu_custom_call.1} parent=1 // pred_check
      _
    $region23: #{tpu_custom_call.1} parent=1 // pred_check_branch
      %169 = sbr.rel (0) target = $region25
    $region24: #{tpu_custom_call.1} parent=1 // pred_region
      %s171 = ssub.s32 256, 256
      %172 = vsyncadd [#allocation4], %s171
      %s173 = sshll.u32 [#allocation7], 4
      %s174 = int_to_ptr.vmem [resolvable:$true] %s173
      %179 = dma.vmem_to_hbm [thread:$0]  %s174, 256, %s3, [#allocation4], 128, 128, 8
    $region25: #{tpu_custom_call.1} parent=1 // pred_fallthru
      _
    // Predicated region
    $region26: #{tpu_custom_call.1} parent=1 // pred_check
      _
    $region27: #{tpu_custom_call.1} parent=1 // pred_check_branch
      %181 = sbr.rel (0) target = $region29
    $region28: #{tpu_custom_call.1} parent=1 // pred_region
      %182 = dma.done [#allocation4], 256
    $region29: #{tpu_custom_call.1} parent=1 // pred_fallthru
      _
    %183 = vsyncpa [#allocation3], 1
    %184 = vsyncpa [#allocation6], 1
    %185 = vsyncpa [#allocation4], 1

</llo_original>
